<compile_context>
chip_gen: v6e
topology: v6e:2x2x1
jax: 0.10.0
libtpu: 0.0.40
codegen_flags: <defaults>
</compile_context>

<pallas_src>
from typing import NamedTuple, Optional

import numpy as np
import jax
import jax.numpy as jnp
from jax.experimental import pallas as pl
from jax.experimental.pallas import tpu as pltpu


# ----------------------------------------------------------------------------- kernels
def _hyperlayer_kernel(z_ref, wt_ref, b_ref, o_ref):
    # z_ref : (B, K)    VMEM, resident across the N grid
    # wt_ref: (K, TN)   VMEM, pre-transposed weight tile (lane-dense)
    # b_ref : (1, TN)   VMEM, f32 bias row tile
    # o_ref : (B, TN)   VMEM
    acc = jnp.dot(z_ref[...], wt_ref[...], preferred_element_type=jnp.float32)
    o_ref[...] = (acc + b_ref[...].astype(jnp.float32)).astype(o_ref.dtype)


def _hyperlayer_kernel_q(z_ref, wq_ref, s_ref, b_ref, o_ref):
    # int8 weight tile, dequantized in VMEM with a per-output-column f32 scale.
    w = wq_ref[...].astype(jnp.float32) * s_ref[...]          # (K, TN)
    acc = jnp.dot(z_ref[...], w, preferred_element_type=jnp.float32)
    o_ref[...] = (acc + b_ref[...]).astype(o_ref.dtype)


# ------------------------------------------------------------------------ param prep
class HyperHead(NamedTuple):
    wt: jax.Array               # (K, Np)  pre-transposed, N padded to 128-multiple
    bias: jax.Array             # (1, Np)  f32
    scale: Optional[jax.Array]  # (1, Np)  f32 per-column scale (int8 path) or None
    n: int                      # true out_features (before padding)


def _round_up(x, m):
    return ((x + m - 1) // m) * m


def prepare_hyperlayer_params(weight, bias=None, *, weight_dtype=jnp.float32,
                              quantize_int8=False):
    """One-time prep (call at init, keep the result):
    transpose to (K, N), pad N to a 128-multiple, and store the weight persistently
    in `weight_dtype` (f32/bf16) or as int8 + per-column f32 scale."""
    out_features, in_features = weight.shape
    wt = jnp.asarray(weight, jnp.float32).T                     # (K, N)
    b = (jnp.zeros((out_features,), jnp.float32) if bias is None
         else jnp.asarray(bias, jnp.float32))
    n_pad = _round_up(out_features, 128)
    if n_pad != out_features:
        wt = jnp.pad(wt, ((0, 0), (0, n_pad - out_features)))
        b = jnp.pad(b, (0, n_pad - out_features))
    b2d = b.reshape(1, n_pad)
    if quantize_int8:
        amax = jnp.max(jnp.abs(wt), axis=0, keepdims=True)      # (1, Np)
        scale = jnp.maximum(amax, 1e-12) / 127.0
        wq = jnp.clip(jnp.round(wt / scale), -127, 127).astype(jnp.int8)
        return HyperHead(wq, b2d, scale.astype(jnp.float32), out_features)
    return HyperHead(wt.astype(weight_dtype), b2d, None, out_features)


def fuse_hyperlayer_heads(heads):
    """Fuse prepared heads sharing the same z into one head along the (padded,
    lane-aligned) out-feature axis.  Returns (fused_head, segments) where
    segments = [(padded_offset, true_n), ...] for split_fused_output."""
    assert all(h.wt.dtype == heads[0].wt.dtype for h in heads), "mixed weight dtypes"
    assert all((h.scale is None) == (heads[0].scale is None) for h in heads)
    wt = jnp.concatenate([h.wt for h in heads], axis=1)
    b = jnp.concatenate([h.bias for h in heads], axis=1)
    scale = (None if heads[0].scale is None
             else jnp.concatenate([h.scale for h in heads], axis=1))
    segments, off = [], 0
    for h in heads:
        segments.append((off, h.n))
        off += h.wt.shape[1]
    return HyperHead(wt, b, scale, wt.shape[1]), segments


def split_fused_output(out, segments):
    """Slice a fused (B, Np_total) output back into per-head (B, n_true) outputs."""
    return [out[:, off:off + n] for off, n in segments]


# --------------------------------------------------------------------------- tiling
def _pick_tile_n(n_pad, per_col_bytes, vmem_budget_bytes):
    """Largest lane-dense (128-multiple) tile that (a) fits the VMEM budget with
    double buffering, (b) divides n_pad, and (c) keeps >=2 grid steps when n_pad
    is big enough (v7x megacore split; near-free on 1-TC chips)."""
    tn_max = max(128, (vmem_budget_bytes // max(per_col_bytes, 1)) // 128 * 128)
    cap = tn_max
    if n_pad >= 256:
        cap = min(cap, max(128, ((n_pad // 2) // 128) * 128))
    tn = max(128, min(cap, n_pad))
    tn -= tn % 128
    while n_pad % tn != 0:      # terminates: 128 always divides n_pad
        tn -= 128
    return tn, n_pad // tn


# --------------------------------------------------------------------------- forward
def hyperlayer_forward_t(z, head: HyperHead, *, out_dtype=None,
                         vmem_budget_bytes=24 << 20, vmem_limit_bytes=48 << 20,
                         trim=True):
    """Fused HyperLayer forward with a prepared head: out = z @ W^T + b."""
    B, K = z.shape
    Kw, Np = head.wt.shape
    assert K == Kw, f"noise_dim mismatch: z has {K}, weight has {Kw}"
    assert Np % 128 == 0, "head must come from prepare_hyperlayer_params"
    quant = head.scale is not None

    if out_dtype is None:
        # bf16 weights -> bf16 writeback (output stream dominates when B > K).
        out_dtype = head.wt.dtype if not quant else z.dtype
    if quant:
        z = z.astype(jnp.float32)            # dequantized weight is f32 in-kernel
    else:
        z = z.astype(head.wt.dtype)          # cheap per-call cast of the tiny z only

    w_bytes = jnp.dtype(head.wt.dtype).itemsize
    o_bytes = jnp.dtype(out_dtype).itemsize
    per_col = 2 * (K * w_bytes + B * o_bytes + 4 + (4 if quant else 0))
    tn, grid_n = _pick_tile_n(Np, per_col, vmem_budget_bytes)

    in_specs = [
        pl.BlockSpec((B, K), lambda j: (0, 0)),      # z resident across N tiles
        pl.BlockSpec((K, tn), lambda j: (0, j)),     # weight streamed, lane-dense
    ]
    args = [z, head.wt]
    if quant:
        in_specs.append(pl.BlockSpec((1, tn), lambda j: (0, j)))   # per-column scale
        args.append(head.scale)
    in_specs.append(pl.BlockSpec((1, tn), lambda j: (0, j)))       # bias row
    args.append(head.bias)

    out = pl.pallas_call(
        _hyperlayer_kernel_q if quant else _hyperlayer_kernel,
        out_shape=jax.ShapeDtypeStruct((B, Np), out_dtype),
        grid=(grid_n,),
        in_specs=in_specs,
        out_specs=pl.BlockSpec((B, tn), lambda j: (0, j)),
        compiler_params=pltpu.CompilerParams(
            dimension_semantics=("parallel",),       # megacore split on v7x
            vmem_limit_bytes=vmem_limit_bytes,       # portable across 16/32 MiB defaults
        ),
    )(*args)

    if trim and head.n != Np:
        out = out[:, :head.n]
    return out


def hyperlayer_forward(z, weight, bias=None):
    """Convenience one-shot path matching the original (out = z @ W^T + b).
    Prefer prepare_hyperlayer_params once + hyperlayer_forward_t in a real loop."""
    return hyperlayer_forward_t(z, prepare_hyperlayer_params(weight, bias))


# ------------------------------------------------------------------------------ init
def init_hyperlayer_params(key, noise_dim, hidden_dim, action_dim,
                           out_type="weight", use_bias=True):
    """Deterministic parameter init mirroring HyperLayer.__init__ shapes.
    weight_init='xavier_normal', bias_init='default' (uniform +-1/sqrt(in))."""
    in_features = noise_dim
    out_features = action_dim * hidden_dim if out_type == "weight" else action_dim
    kw, kb = jax.random.split(key)
    xavier_std = np.sqrt(2.0 / (in_features + out_features))
    weight = xavier_std * jax.random.normal(kw, (out_features, in_features), jnp.float32)
    if use_bias:
        bound = 1.0 / np.sqrt(in_features)
        bias = jax.random.uniform(kb, (out_features,), jnp.float32, -bound, bound)
    else:
        bias = jnp.zeros((out_features,), jnp.float32)
    return weight, bias


# ------------------------------------------------------------------------------ demo
if __name__ == "__main__":
    noise_dim, hidden_dim, action_dim = 8, 32, 4
    key = jax.random.PRNGKey(0)
    kz1, kz2, kw_head, kb_head, kens = jax.random.split(key, 5)

    # ---- Case A: single 'weight'-type head (N=128), tiny batch, f32 ---------------
    w_w, b_w = init_hyperlayer_params(kw_head, noise_dim, hidden_dim, action_dim,
                                      out_type="weight")
    head_w = prepare_hyperlayer_params(w_w, b_w)               # done once
    z_small = jax.random.normal(kz1, (2, noise_dim), jnp.float32)

    out_a = jax.block_until_ready(hyperlayer_forward_t(z_small, head_w))
    ref_a = z_small @ w_w.T + b_w
    assert out_a.shape == (2, action_dim * hidden_dim)
    np.testing.assert_allclose(np.asarray(out_a), np.asarray(ref_a),
                               rtol=1e-5, atol=1e-5)

    # ---- Case B: fuse 'weight' head + 'bias' head (N=4, padded to 128), shared z --
    w_b, b_b = init_hyperlayer_params(kb_head, noise_dim, hidden_dim, action_dim,
                                      out_type="bias")
    head_b = prepare_hyperlayer_params(w_b, b_b)
    fused_wb, segs_wb = fuse_hyperlayer_heads([head_w, head_b])

    z_batch = jax.random.normal(kz2, (16, noise_dim), jnp.float32)
    out_b = jax.block_until_ready(hyperlayer_forward_t(z_batch, fused_wb))
    out_b_w, out_b_b = split_fused_output(out_b, segs_wb)
    np.testing.assert_allclose(np.asarray(out_b_w), np.asarray(z_batch @ w_w.T + b_w),
                               rtol=1e-5, atol=1e-5)
    np.testing.assert_allclose(np.asarray(out_b_b), np.asarray(z_batch @ w_b.T + b_b),
                               rtol=1e-5, atol=1e-5)

    # ---- Case C: ensemble of 8 'weight' heads, persistent bf16 weights + bf16 out -
    ens_w, ens_b = [], []
    for k in jax.random.split(kens, 8):
        w_i, b_i = init_hyperlayer_params(k, noise_dim, hidden_dim, action_dim)
        ens_w.append(w_i); ens_b.append(b_i)
    heads_bf16 = [prepare_hyperlayer_params(w, b, weight_dtype=jnp.bfloat16)
                  for w, b in zip(ens_w, ens_b)]
    fused_bf16, segs_ens = fuse_hyperlayer_heads(heads_bf16)   # (8, 1024), tiled grid=2
    ref_c = jnp.concatenate([z_batch @ w.T + b for w, b in zip(ens_w, ens_b)], axis=1)

    out_c = jax.block_until_ready(hyperlayer_forward_t(z_batch, fused_bf16))
    assert out_c.dtype == jnp.bfloat16                          # bf16 HBM writeback
    np.testing.assert_allclose(np.asarray(out_c, dtype=np.float32),
                               np.asarray(ref_c), rtol=2e-2, atol=2e-2)

    # ---- Case D: same ensemble with int8 weights (per-column scale), f32 out ------
    heads_i8 = [prepare_hyperlayer_params(w, b, quantize_int8=True)
                for w, b in zip(ens_w, ens_b)]
    fused_i8, _ = fuse_hyperlayer_heads(heads_i8)
    out_d = jax.block_until_ready(hyperlayer_forward_t(z_batch, fused_i8))
    assert out_d.dtype == jnp.float32
    np.testing.assert_allclose(np.asarray(out_d), np.asarray(ref_c),
                               rtol=5e-2, atol=5e-2)

    print("KERNEL_OK")
</pallas_src>

<mosaic_0001>
module attributes {stable_mosaic.version = 11 : i64} {
  func.func @_hyperlayer_kernel(%arg0: i32, %arg1: memref<2x8xf32, #tpu.memory_space<vmem>>, %arg2: memref<8x128xf32, #tpu.memory_space<vmem>>, %arg3: memref<1x128xf32, #tpu.memory_space<vmem>>, %arg4: memref<2x128xf32, #tpu.memory_space<vmem>>) attributes {dimension_semantics = [#tpu.dimension_semantics<parallel>], iteration_bounds = array<i64: 1>, scalar_prefetch = 0 : i64, scratch_operands = 0 : i64, tpu.core_type = #tpu.core_type<tc>, window_params = [{pipeline_mode = #tpu.pipeline_mode<synchronous>, transform_indices = @transform_0, window_bounds = array<i64: 2, 8>}, {transform_indices = @transform_1, window_bounds = array<i64: 8, 128>}, {transform_indices = @transform_2, window_bounds = array<i64: 1, 128>}, {transform_indices = @transform_3, window_bounds = array<i64: 2, 128>}]} {
    %c0 = arith.constant 0 : index
    %c0_0 = arith.constant 0 : index
    %0 = vector.load %arg1[%c0, %c0_0] : memref<2x8xf32, #tpu.memory_space<vmem>>, vector<2x8xf32>
    %c0_1 = arith.constant 0 : index
    %c0_2 = arith.constant 0 : index
    %1 = vector.load %arg2[%c0_1, %c0_2] : memref<8x128xf32, #tpu.memory_space<vmem>>, vector<8x128xf32>
    %cst = arith.constant dense<0.000000e+00> : vector<2x128xf32>
    %2 = tpu.matmul %0, %1, %cst {dimension_numbers = #tpu.dot_dimension_numbers<[1], [0], [0], [1], [0, 0, 1, 1], [], []>} : vector<2x8xf32>, vector<8x128xf32>, vector<2x128xf32> -> vector<2x128xf32>
    %c0_3 = arith.constant 0 : index
    %c0_4 = arith.constant 0 : index
    %3 = vector.load %arg3[%c0_3, %c0_4] : memref<1x128xf32, #tpu.memory_space<vmem>>, vector<1x128xf32>
    %4 = vector.broadcast %3 : vector<1x128xf32> to vector<2x128xf32>
    %5 = arith.addf %2, %4 : vector<2x128xf32>
    %c0_5 = arith.constant 0 : index
    %c0_6 = arith.constant 0 : index
    %6 = vector.load %arg4[%c0_5, %c0_6] : memref<2x128xf32, #tpu.memory_space<vmem>>, vector<2x128xf32>
    tpu.vector_store %arg4[%c0_5, %c0_6], %5 {strides = array<i32>} : memref<2x128xf32, #tpu.memory_space<vmem>>, vector<2x128xf32>,
    return
  }
  func.func @transform_0(%arg0: i32) -> (i32, i32) {
    %c0_i32 = arith.constant 0 : i32
    %c0_i32_0 = arith.constant 0 : i32
    %c0_i32_1 = arith.constant 0 : i32
    return %c0_i32, %c0_i32_0 : i32, i32
  }
  func.func @transform_1(%arg0: i32) -> (i32, i32) {
    %c0_i32 = arith.constant 0 : i32
    %c0_i32_0 = arith.constant 0 : i32
    return %c0_i32, %arg0 : i32, i32
  }
  func.func @transform_2(%arg0: i32) -> (i32, i32) {
    %c0_i32 = arith.constant 0 : i32
    %c0_i32_0 = arith.constant 0 : i32
    return %c0_i32, %arg0 : i32, i32
  }
  func.func @transform_3(%arg0: i32) -> (i32, i32) {
    %c0_i32 = arith.constant 0 : i32
    %c0_i32_0 = arith.constant 0 : i32
    return %c0_i32, %arg0 : i32, i32
  }
}

</mosaic_0001>

<llo_original>
// kernel: tpu_custom_call.1
$region0: #{tpu_custom_call.1}
  #allocation0 [shape = 'u32[]', space=smem, size = 0x4, offset = 0x4, fixed_abs, tag = 'smem constant byte address 0x4 - core index']
  #allocation1 [shape = 'u32[144,128]{1,0:T(1,128)}', space=vmem, size = 0x12000, scoped, tag = 'internal scratch']
  %s0 = inlined_call_operand.hbm [shape: f32[2,8], index: 0, kind: input, shape index: {}]
  %s1 = inlined_call_operand.hbm [shape: f32[8,128], index: 1, kind: input, shape index: {}]
  %s2 = inlined_call_operand.vmem [shape: f32[1,128], index: 2, kind: input, shape index: {}]
  %s3 = inlined_call_operand.hbm [shape: f32[2,128], index: 3, kind: output, shape index: {}]
  %s4 = sld [smem:[#allocation0]]
  $region30: #{tpu_custom_call.1} parent=0
    _
  %s6 = ssub.s32 1, %s4
  %s7 = scalar_select 0, %s6, %s4
  $region1: #{tpu_custom_call.1} parent=0
    #allocation2 [shape = 'u8[1024]{0}', space=vmem, size = 0x400, scoped, tag = 'input window, operand 0, single buffered']
    #allocation3 [shape = 's32[1]{0}', space=sflag, size = 0x4, scoped, tag = 'scoped memory for tpu_custom_call.1']
    #allocation4 [shape = 's32[1]{0}', space=sflag, size = 0x4, scoped, tag = 'scoped memory for tpu_custom_call.1']
    #allocation5 [shape = 'u8[4096]{0}', space=vmem, size = 0x1000, scoped, tag = 'input window, operand 1, single buffered']
    #allocation6 [shape = 's32[1]{0}', space=sflag, size = 0x4, scoped, tag = 'scoped memory for tpu_custom_call.1']
    #allocation7 [shape = 'u8[1024]{0}', space=vmem, size = 0x400, scoped, tag = 'output window, operand 0, single buffered']
    %8 = vsyncpa [#allocation3], 0
    %9 = vsyncpa [#allocation6], 0
    %10 = vsyncpa [#allocation4], 0
    // Predicated region
    $region2: #{tpu_custom_call.1} parent=1 // pred_check
      _
    $region3: #{tpu_custom_call.1} parent=1 // pred_check_branch
      %12 = sbr.rel (0) target = $region5
    $region4: #{tpu_custom_call.1} parent=1 // pred_region
      %s14 = ssub.s32 32, 32
      %15 = vsyncadd [#allocation3], %s14
      %s17 = sshll.u32 [#allocation2], 4
      %s18 = int_to_ptr.vmem [resolvable:$true] %s17
      %20 = dma.hbm_to_vmem [thread:$0]  %s0, 32, %s18, [#allocation3]
    $region5: #{tpu_custom_call.1} parent=1 // pred_fallthru
      _
    // Predicated region
    $region6: #{tpu_custom_call.1} parent=1 // pred_check
      _
    $region7: #{tpu_custom_call.1} parent=1 // pred_check_branch
      %22 = sbr.rel (0) target = $region9
    $region8: #{tpu_custom_call.1} parent=1 // pred_region
      %s24 = ssub.s32 128, 128
      %25 = vsyncadd [#allocation6], %s24
      %s27 = sshll.u32 [#allocation5], 4
      %s28 = int_to_ptr.vmem [resolvable:$true] %s27
      %30 = dma.hbm_to_vmem [thread:$0]  %s1, 128, %s28, [#allocation6]
    $region9: #{tpu_custom_call.1} parent=1 // pred_fallthru
      _
    // Predicated region
    $region10: #{tpu_custom_call.1} parent=1 // pred_check
      _
    $region11: #{tpu_custom_call.1} parent=1 // pred_check_branch
      %32 = sbr.rel (0) target = $region13
    $region12: #{tpu_custom_call.1} parent=1 // pred_region
      _
    $region13: #{tpu_custom_call.1} parent=1 // pred_fallthru
      _
    // Predicated region
    $region14: #{tpu_custom_call.1} parent=1 // pred_check
      _
    $region15: #{tpu_custom_call.1} parent=1 // pred_check_branch
      %34 = sbr.rel (0) target = $region17
    $region16: #{tpu_custom_call.1} parent=1 // pred_region
      %35 = dma.done [#allocation3], 32
    $region17: #{tpu_custom_call.1} parent=1 // pred_fallthru
      _
    // Predicated region
    $region18: #{tpu_custom_call.1} parent=1 // pred_check
      _
    $region19: #{tpu_custom_call.1} parent=1 // pred_check_branch
      %37 = sbr.rel (0) target = $region21
    $region20: #{tpu_custom_call.1} parent=1 // pred_region
      %38 = dma.done [#allocation6], 128
    $region21: #{tpu_custom_call.1} parent=1 // pred_fallthru
      _
    %v39 = vld [vmem:[#allocation2] sm:$0x3]
    %v40 = vld [vmem:[#allocation5] sm:$0xff]
    %v41 = vld [vmem:[%s2] sm:$0x1]
    %v43 = vlaneseq
    %v44 = vshrl.u32 %v43, 7
    %v45 = vsub.s32 0, %v44
    %v46 = vrot.slane %v41, %v45
    %vm48 = vcmask 64512
    %v50 = vsel %vm48, %v39, 0
    %52 = vmatprep.subr.mxu0 0.0
    %53 = vmatpush1.msra.mxu0 0.0
    %54 = vmatprep.subr.mxu0 0.0
    %55 = vmatpush1.msra.mxu0 0.0
    %56 = vmatprep.subr.mxu0 0.0
    %57 = vmatpush1.msra.mxu0 0.0
    %58 = vmatprep.subr.mxu0 0.0
    %59 = vmatpush1.msra.mxu0 0.0
    %60 = vmatprep.subr.mxu0 0.0
    %61 = vmatpush1.msra.mxu0 0.0
    %62 = vmatprep.subr.mxu0 0.0
    %63 = vmatpush1.msra.mxu0 0.0
    %64 = vmatprep.subr.mxu0 0.0
    %65 = vmatpush1.msra.mxu0 0.0
    %66 = vmatprep.subr.mxu0 0.0
    %67 = vmatpush1.msra.mxu0 0.0
    %68 = vmatprep.subr.mxu0 0.0
    %69 = vmatpush1.msra.mxu0 0.0
    %70 = vmatprep.subr.mxu0 0.0
    %71 = vmatpush1.msra.mxu0 0.0
    %72 = vmatprep.subr.mxu0 0.0
    %73 = vmatpush1.msra.mxu0 0.0
    %74 = vmatprep.subr.mxu0 0.0
    %75 = vmatpush1.msra.mxu0 0.0
    %76 = vmatprep.subr.mxu0 0.0
    %77 = vmatpush1.msra.mxu0 0.0
    %78 = vmatprep.subr.mxu0 0.0
    %79 = vmatpush1.msra.mxu0 0.0
    %80 = vmatprep.subr.mxu0 0.0
    %81 = vmatpush1.msra.mxu0 0.0
    %82 = vmatprep.subr.mxu0 0.0
    %83 = vmatpush1.msra.mxu0 %v40
    %84 = vmatprep.subr.mxu0 0.0
    %85 = vmatpush2.msra.mxu0 0.0
    %86 = vmatprep.subr.mxu0 0.0
    %87 = vmatpush2.msra.mxu0 0.0
    %88 = vmatprep.subr.mxu0 0.0
    %89 = vmatpush2.msra.mxu0 0.0
    %90 = vmatprep.subr.mxu0 0.0
    %91 = vmatpush2.msra.mxu0 0.0
    %92 = vmatprep.subr.mxu0 0.0
    %93 = vmatpush2.msra.mxu0 0.0
    %94 = vmatprep.subr.mxu0 0.0
    %95 = vmatpush2.msra.mxu0 0.0
    %96 = vmatprep.subr.mxu0 0.0
    %97 = vmatpush2.msra.mxu0 0.0
    %98 = vmatprep.subr.mxu0 0.0
    %99 = vmatpush2.msra.mxu0 0.0
    %100 = vmatprep.subr.mxu0 0.0
    %101 = vmatpush2.msra.mxu0 0.0
    %102 = vmatprep.subr.mxu0 0.0
    %103 = vmatpush2.msra.mxu0 0.0
    %104 = vmatprep.subr.mxu0 0.0
    %105 = vmatpush2.msra.mxu0 0.0
    %106 = vmatprep.subr.mxu0 0.0
    %107 = vmatpush2.msra.mxu0 0.0
    %108 = vmatprep.subr.mxu0 0.0
    %109 = vmatpush2.msra.mxu0 0.0
    %110 = vmatprep.subr.mxu0 0.0
    %111 = vmatpush2.msra.mxu0 0.0
    %112 = vmatprep.subr.mxu0 0.0
    %113 = vmatpush2.msra.mxu0 0.0
    %114 = vmatprep.subr.mxu0 0.0
    %115 = vmatpush2.msra.mxu0 0.0
    %116 = vmatprep.mubr.f32.mxu0 0.0
    %117 = vmatmul.mubr.f32.gmra.mxu0 %v50
    %v118 = vpop.f32.mrf.mxu0
    %v119 = vadd.f32 %v46, %v118
    %v120 = vpop.f32.mrf.mxu0
    %121 = vdwg.mxu0
    %122 = vst [vmem:[#allocation7] sm:$0x3] %v119
    // Predicated region
    $region22: #{tpu_custom_call.1} parent=1 // pred_check
      _
    $region23: #{tpu_custom_call.1} parent=1 // pred_check_branch
      %124 = sbr.rel (0) target = $region25
    $region24: #{tpu_custom_call.1} parent=1 // pred_region
      %s126 = ssub.s32 32, 32
      %127 = vsyncadd [#allocation4], %s126
      %s129 = sshll.u32 [#allocation7], 4
      %s130 = int_to_ptr.vmem [resolvable:$true] %s129
      %132 = dma.vmem_to_hbm [thread:$0]  %s130, 32, %s3, [#allocation4]
    $region25: #{tpu_custom_call.1} parent=1 // pred_fallthru
      _
    // Predicated region
    $region26: #{tpu_custom_call.1} parent=1 // pred_check
      _
    $region27: #{tpu_custom_call.1} parent=1 // pred_check_branch
      %134 = sbr.rel (0) target = $region29
    $region28: #{tpu_custom_call.1} parent=1 // pred_region
      %135 = dma.done [#allocation4], 32
    $region29: #{tpu_custom_call.1} parent=1 // pred_fallthru
      _
    %136 = vsyncpa [#allocation3], 1
    %137 = vsyncpa [#allocation6], 1
    %138 = vsyncpa [#allocation4], 1

</llo_original>
